<compile_context>
chip_gen: v5e
topology: v5e:2x2
jax: 0.10.0
libtpu: 0.0.40
codegen_flags: <defaults>
</compile_context>

<pallas_src>
import jax
import jax.numpy as jnp
from jax.experimental import pallas as pl
from jax.experimental.pallas import tpu as pltpu


def _round_up(x, m):
    return (x + m - 1) // m * m


def _linear_kernel(x_ref, w_ref, b_ref, o_ref, acc_ref):
    # x_ref: (tm, tk), w_ref: (tk, tn), b_ref: (1, tn) f32,
    # o_ref: (tm, tn), acc_ref: (tm, tn) f32 scratch.
    k = pl.program_id(2)

    @pl.when(k == 0)
    def _():
        acc_ref[...] = jnp.zeros_like(acc_ref)

    acc_ref[...] += jnp.dot(
        x_ref[...], w_ref[...], preferred_element_type=jnp.float32
    )

    @pl.when(k == pl.num_programs(2) - 1)
    def _():
        # Bias added exactly once, in the epilogue.
        o_ref[...] = (acc_ref[...] + b_ref[...]).astype(o_ref.dtype)


def coarse_block_forward(x, weight, bias, *, compute_dtype=None,
                         tm=128, tn=256, tk=512):
    """Forward pass of CoarseBlock.

    x:      (B, C, H, W)
    weight: (in_features, out_features)  == torch weight transposed
    bias:   (out_features,)
    compute_dtype: optional (e.g. jnp.bfloat16) dtype for the MXU inputs;
                   accumulation is always f32. Default None keeps f32 inputs
                   (bit-for-bit module semantics).
    """
    B = x.shape[0]
    F, O = weight.shape
    out_dtype = x.dtype

    # Flatten (glue; matches torch.nn.Flatten row-major over C, H, W).
    x_flat = x.reshape(B, -1)
    assert x_flat.shape[1] == F, "Linear in_features must equal C*H*W"

    if compute_dtype is not None:
        x_flat = x_flat.astype(compute_dtype)
        weight = weight.astype(compute_dtype)

    # Tile sizes: lane-dense N (multiple of 128, 256 default for v6e/v7x MXU),
    # sublane-aligned M (multiple of 8), large K tile for the weight stream.
    tm = min(tm, _round_up(B, 8))
    tn = min(tn, _round_up(O, 128))
    tk = min(tk, _round_up(F, 128))

    M_pad = _round_up(B, tm)
    N_pad = _round_up(O, tn)
    K_pad = _round_up(F, tk)

    # Zero padding (glue): extra rows/cols of zeros do not change the matmul.
    if (M_pad, K_pad) != (B, F):
        x_flat = jnp.pad(x_flat, ((0, M_pad - B), (0, K_pad - F)))
    if (K_pad, N_pad) != (F, O):
        weight = jnp.pad(weight, ((0, K_pad - F), (0, N_pad - O)))
    b2d = bias.reshape(1, O).astype(jnp.float32)
    if N_pad != O:
        b2d = jnp.pad(b2d, ((0, 0), (0, N_pad - O)))

    grid = (M_pad // tm, N_pad // tn, K_pad // tk)

    in_bytes = jnp.dtype(x_flat.dtype).itemsize
    out_bytes = jnp.dtype(out_dtype).itemsize
    cost = pl.CostEstimate(
        flops=2 * M_pad * K_pad * N_pad,
        transcendentals=0,
        bytes_accessed=(M_pad * K_pad * in_bytes
                        + K_pad * N_pad * in_bytes
                        + N_pad * 4
                        + M_pad * N_pad * out_bytes),
    )

    out = pl.pallas_call(
        _linear_kernel,
        out_shape=jax.ShapeDtypeStruct((M_pad, N_pad), out_dtype),
        grid_spec=pltpu.PrefetchScalarGridSpec(
            num_scalar_prefetch=0,
            grid=grid,
            in_specs=[
                pl.BlockSpec((tm, tk), lambda i, j, k: (i, k)),
                pl.BlockSpec((tk, tn), lambda i, j, k: (k, j)),
                pl.BlockSpec((1, tn), lambda i, j, k: (0, j)),
            ],
            out_specs=pl.BlockSpec((tm, tn), lambda i, j, k: (i, j)),
            scratch_shapes=[pltpu.VMEM((tm, tn), jnp.float32)],
        ),
        compiler_params=pltpu.CompilerParams(
            dimension_semantics=("parallel", "parallel", "arbitrary"),
        ),
        cost_estimate=cost,
    )(x_flat, weight, b2d)

    # Slice the zero padding back off.
    return out[:B, :O]


if __name__ == "__main__":
    key = jax.random.PRNGKey(0)
    k_x, k_w, k_b = jax.random.split(key, 3)

    # Small shapes consistent with the module: Linear's in_features == C*H*W.
    B, C, H, W = 2, 4, 16, 16
    in_features = C * H * W          # 1024
    out_features = 32

    x = jax.random.normal(k_x, (B, C, H, W), dtype=jnp.float32)

    # Deterministic init mimicking nn.Linear: U(-1/sqrt(in), 1/sqrt(in)).
    bound = 1.0 / (in_features ** 0.5)
    weight = jax.random.uniform(
        k_w, (in_features, out_features), dtype=jnp.float32,
        minval=-bound, maxval=bound)
    bias = jax.random.uniform(
        k_b, (out_features,), dtype=jnp.float32, minval=-bound, maxval=bound)

    y = coarse_block_forward(x, weight, bias)
    jax.block_until_ready(y)

    # Reference check in plain JAX.
    y_ref = x.reshape(B, -1) @ weight + bias
    assert y.shape == (B, out_features)
    assert jnp.allclose(y, y_ref, atol=1e-4, rtol=1e-4)

    print("KERNEL_OK")
</pallas_src>

<mosaic_0001>
module attributes {stable_mosaic.version = 11 : i64} {
  func.func @_linear_kernel(%arg0: i32, %arg1: i32, %arg2: i32, %arg3: memref<8x512xf32, #tpu.memory_space<vmem>>, %arg4: memref<512x128xf32, #tpu.memory_space<vmem>>, %arg5: memref<1x128xf32, #tpu.memory_space<vmem>>, %arg6: memref<8x128xf32, #tpu.memory_space<vmem>>, %arg7: memref<8x128xf32, #tpu.memory_space<vmem>>) attributes {dimension_semantics = [#tpu.dimension_semantics<parallel>, #tpu.dimension_semantics<parallel>, #tpu.dimension_semantics<arbitrary>], iteration_bounds = array<i64: 1, 1, 2>, scalar_prefetch = 0 : i64, scratch_operands = 1 : i64, tpu.core_type = #tpu.core_type<tc>, window_params = [{transform_indices = @transform_0, window_bounds = array<i64: 8, 512>}, {transform_indices = @transform_1, window_bounds = array<i64: 512, 128>}, {transform_indices = @transform_2, window_bounds = array<i64: 1, 128>}, {transform_indices = @transform_3, window_bounds = array<i64: 8, 128>}]} {
    %c0_i32 = arith.constant 0 : i32
    %0 = arith.cmpi eq, %arg2, %c0_i32 : i32
    %1 = arith.extui %0 : i1 to i32
    %c0_i32_0 = arith.constant 0 : i32
    %2 = arith.cmpi ne, %1, %c0_i32_0 : i32
    scf.if %2 {
      %cst_9 = arith.constant 0.000000e+00 : f32
      %12 = vector.broadcast %cst_9 : f32 to vector<8x128xf32>
      %c0_10 = arith.constant 0 : index
      %c0_11 = arith.constant 0 : index
      %13 = vector.load %arg7[%c0_10, %c0_11] : memref<8x128xf32, #tpu.memory_space<vmem>>, vector<8x128xf32>
      tpu.vector_store %arg7[%c0_10, %c0_11], %12 {strides = array<i32>} : memref<8x128xf32, #tpu.memory_space<vmem>>, vector<8x128xf32>,
    } else {
    }
    %c0 = arith.constant 0 : index
    %c0_1 = arith.constant 0 : index
    %3 = vector.load %arg7[%c0, %c0_1] : memref<8x128xf32, #tpu.memory_space<vmem>>, vector<8x128xf32>
    %c0_2 = arith.constant 0 : index
    %c0_3 = arith.constant 0 : index
    %4 = vector.load %arg3[%c0_2, %c0_3] : memref<8x512xf32, #tpu.memory_space<vmem>>, vector<8x512xf32>
    %c0_4 = arith.constant 0 : index
    %c0_5 = arith.constant 0 : index
    %5 = vector.load %arg4[%c0_4, %c0_5] : memref<512x128xf32, #tpu.memory_space<vmem>>, vector<512x128xf32>
    %cst = arith.constant dense<0.000000e+00> : vector<8x128xf32>
    %6 = tpu.matmul %4, %5, %cst {dimension_numbers = #tpu.dot_dimension_numbers<[1], [0], [0], [1], [0, 0, 1, 1], [], []>} : vector<8x512xf32>, vector<512x128xf32>, vector<8x128xf32> -> vector<8x128xf32>
    %7 = arith.addf %3, %6 : vector<8x128xf32>
    %c0_6 = arith.constant 0 : index
    %c0_7 = arith.constant 0 : index
    %8 = vector.load %arg7[%c0_6, %c0_7] : memref<8x128xf32, #tpu.memory_space<vmem>>, vector<8x128xf32>
    tpu.vector_store %arg7[%c0_6, %c0_7], %7 {strides = array<i32>} : memref<8x128xf32, #tpu.memory_space<vmem>>, vector<8x128xf32>,
    %c1_i32 = arith.constant 1 : i32
    %9 = arith.cmpi eq, %arg2, %c1_i32 : i32
    %10 = arith.extui %9 : i1 to i32
    %c0_i32_8 = arith.constant 0 : i32
    %11 = arith.cmpi ne, %10, %c0_i32_8 : i32
    scf.if %11 {
      %c0_9 = arith.constant 0 : index
      %c0_10 = arith.constant 0 : index
      %12 = vector.load %arg7[%c0_9, %c0_10] : memref<8x128xf32, #tpu.memory_space<vmem>>, vector<8x128xf32>
      %c0_11 = arith.constant 0 : index
      %c0_12 = arith.constant 0 : index
      %13 = vector.load %arg5[%c0_11, %c0_12] : memref<1x128xf32, #tpu.memory_space<vmem>>, vector<1x128xf32>
      %14 = vector.broadcast %13 : vector<1x128xf32> to vector<8x128xf32>
      %15 = arith.addf %12, %14 : vector<8x128xf32>
      %c0_13 = arith.constant 0 : index
      %c0_14 = arith.constant 0 : index
      %16 = vector.load %arg6[%c0_13, %c0_14] : memref<8x128xf32, #tpu.memory_space<vmem>>, vector<8x128xf32>
      tpu.vector_store %arg6[%c0_13, %c0_14], %15 {strides = array<i32>} : memref<8x128xf32, #tpu.memory_space<vmem>>, vector<8x128xf32>,
    } else {
    }
    return
  }
  func.func @transform_0(%arg0: i32, %arg1: i32, %arg2: i32) -> (i32, i32) {
    %c0_i32 = arith.constant 0 : i32
    return %arg0, %arg2 : i32, i32
  }
  func.func @transform_1(%arg0: i32, %arg1: i32, %arg2: i32) -> (i32, i32) {
    %c0_i32 = arith.constant 0 : i32
    return %arg2, %arg1 : i32, i32
  }
  func.func @transform_2(%arg0: i32, %arg1: i32, %arg2: i32) -> (i32, i32) {
    %c0_i32 = arith.constant 0 : i32
    %c0_i32_0 = arith.constant 0 : i32
    return %c0_i32, %arg1 : i32, i32
  }
  func.func @transform_3(%arg0: i32, %arg1: i32, %arg2: i32) -> (i32, i32) {
    %c0_i32 = arith.constant 0 : i32
    return %arg0, %arg1 : i32, i32
  }
}

</mosaic_0001>

<llo_original>
// kernel: tpu_custom_call.1
$region0: #{tpu_custom_call.1}
  #allocation0 [shape = 'u32[]', space=smem, size = 0x4, offset = 0x4, fixed_abs, tag = 'smem constant byte address 0x4 - core index']
  #allocation1 [shape = 'u32[72,128]{1,0:T(1,128)}', space=vmem, size = 0x9000, scoped, tag = 'internal scratch']
  #allocation2 [shape = 'f32[8,128]{1,0:T(8,128)}', space=vmem, size = 0x1000, scoped, tag = 'scratch operand']
  %s0 = inlined_call_operand.hbm [shape: f32[8,1024], index: 0, kind: input, shape index: {}]
  %s1 = inlined_call_operand.hbm [shape: f32[1024,128], index: 1, kind: input, shape index: {}]
  %s2 = inlined_call_operand.vmem [shape: f32[1,128], index: 2, kind: input, shape index: {}]
  %s3 = inlined_call_operand.hbm [shape: f32[8,128], index: 3, kind: output, shape index: {}]
  %s4 = sld [smem:[#allocation0]]
  $region61: #{tpu_custom_call.1} parent=0
    _
  %s6 = ssub.s32 1, %s4
  %s7 = scalar_select 0, %s6, %s4
  $region1: #{tpu_custom_call.1} parent=0
    #allocation3 [shape = 'u8[32768]{0}', space=vmem, size = 0x8000, scoped, tag = 'input window, operand 0']
    #allocation4 [shape = 's32[2]{0}', space=sflag, size = 0x8, scoped, tag = 'scoped memory for tpu_custom_call.1']
    #allocation5 [shape = 's32[2]{0}', space=sflag, size = 0x8, scoped, tag = 'scoped memory for tpu_custom_call.1']
    #allocation6 [shape = 'u8[524288]{0}', space=vmem, size = 0x80000, scoped, tag = 'input window, operand 1']
    #allocation7 [shape = 's32[2]{0}', space=sflag, size = 0x8, scoped, tag = 'scoped memory for tpu_custom_call.1']
    #allocation8 [shape = 'u8[4096]{0}', space=vmem, size = 0x1000, scoped, tag = 'output window, operand 0, single buffered']
    %8 = vsyncpa [#allocation4], 0
    %s9 = scalar_lea.sflag [#allocation4], 1
    %10 = vsyncpa %s9, 0
    %11 = vsyncpa [#allocation7], 0
    %s12 = scalar_lea.sflag [#allocation7], 1
    %13 = vsyncpa %s12, 0
    %14 = vsyncpa [#allocation5], 0
    loop: start=0, step=1, limit=4
    $region2: #{tpu_custom_call.1} parent=1 // loop_pre_header
      _
    $region3: #{tpu_custom_call.1} parent=1 // loop_header
      %s16 = sphi 0, %s20
      %p17 = scmp.ge.s32.totalorder %s16, 4
      %s23 = sphi 0, %s42
      %s24 = sphi 0, %s38
      %s25 = sphi 0, %s34
      %s26 = sphi 0, %s23
      %s27 = sphi 0, %s24
      %s28 = sphi 0, %s25
      %s29 = sphi 0, %s26
      %s30 = sphi 0, %s27
      %s31 = sphi 0, %s28
      %s47 = sphi 0, %s49
      %s50 = sphi 0, %s47
      %s51 = sphi 0, %s50
      %s67 = sphi 0, %s51
      %s75 = sphi 0, %s77
      %s78 = sphi 0, %s75
      %s79 = sphi 0, %s78
      %s95 = sphi 0, %s79
      %s101 = sphi 0, %s103
      %s104 = sphi 0, %s101
      %s105 = sphi 0, %s104
      %s121 = sphi 0, %s105
      %s129 = sphi 0, %s131
      %s132 = sphi 0, %s129
      %s133 = sphi 0, %s132
      %s149 = sphi 0, %s133
    $region4: #{tpu_custom_call.1} parent=1 // loop_header_branch
      %19 = sbr.rel (%p17) target = $region8
    $region5: #{tpu_custom_call.1} parent=1 // loop_body
      %s21 = ssub.s32 %s16, 1
      %s22 = ssub.s32 %s16, 2
      %s32 = sadd.s32 1, %s25
      %p33 = scmp.ge.s32.totalorder %s32, 2
      %s34 = scalar_select %p33, 0, %s32
      %s35 = sadd.s32 1, %s24
      %s36 = scalar_select %p33, %s35, %s24
      %p37 = scmp.ge.s32.totalorder %s36, 1
      %s38 = scalar_select %p37, 0, %s36
      %s39 = sadd.s32 1, %s23
      %s40 = scalar_select %p37, %s39, %s23
      %p41 = scmp.ge.s32.totalorder %s40, 1
      %s42 = scalar_select %p41, 0, %s40
      %s43 = ssub.s32 %s23, %s42
      %s44 = ssub.s32 %s25, %s34
      %s45 = sor.u32 %s43, %s44
      %p46 = scmp.eq.s32.totalorder %s45, 0
      %s48 = sadd.s32 %s47, 1
      %s49 = scalar_select %p46, %s47, %s48
      %p52 = pneg %p46
      %p53 = scmp.eq.s32.totalorder %s16, 1
      %p54 = por %p52, %p53
      %p55 = scmp.ne.s32.totalorder %s47, %s50
      %p56 = scmp.eq.s32.totalorder %s16, 0
      %p57 = por %p55, %p56
      %p58 = scmp.ne.s32.totalorder %s47, %s50
      %p59 = scmp.eq.s32.totalorder %s21, 1
      %p60 = por %p58, %p59
      %p61 = scmp.ne.s32.totalorder %s50, %s51
      %p62 = scmp.eq.s32.totalorder %s21, 0
      %p63 = por %p61, %p62
      %p64 = scmp.ne.s32.totalorder %s50, %s51
      %p65 = scmp.eq.s32.totalorder %s22, 1
      %p66 = por %p64, %p65
      %p68 = scmp.ne.s32.totalorder %s51, %s67
      %p69 = scmp.eq.s32.totalorder %s22, 0
      %p70 = por %p68, %p69
      %s71 = ssub.s32 %s25, %s34
      %s72 = ssub.s32 %s24, %s38
      %s73 = sor.u32 %s71, %s72
      %p74 = scmp.eq.s32.totalorder %s73, 0
      %s76 = sadd.s32 %s75, 1
      %s77 = scalar_select %p74, %s75, %s76
      %p80 = pneg %p74
      %p81 = scmp.eq.s32.totalorder %s16, 1
      %p82 = por %p80, %p81
      %p83 = scmp.ne.s32.totalorder %s75, %s78
      %p84 = scmp.eq.s32.totalorder %s16, 0
      %p85 = por %p83, %p84
      %p86 = scmp.ne.s32.totalorder %s75, %s78
      %p87 = scmp.eq.s32.totalorder %s21, 1
      %p88 = por %p86, %p87
      %p89 = scmp.ne.s32.totalorder %s78, %s79
      %p90 = scmp.eq.s32.totalorder %s21, 0
      %p91 = por %p89, %p90
      %p92 = scmp.ne.s32.totalorder %s78, %s79
      %p93 = scmp.eq.s32.totalorder %s22, 1
      %p94 = por %p92, %p93
      %p96 = scmp.ne.s32.totalorder %s79, %s95
      %p97 = scmp.eq.s32.totalorder %s22, 0
      %p98 = por %p96, %p97
      %s99 = ssub.s32 %s24, %s38
      %p100 = scmp.eq.s32.totalorder %s99, 0
      %s102 = sadd.s32 %s101, 1
      %s103 = scalar_select %p100, %s101, %s102
      %p106 = pneg %p100
      %p107 = scmp.eq.s32.totalorder %s16, 1
      %p108 = por %p106, %p107
      %p109 = scmp.ne.s32.totalorder %s101, %s104
      %p110 = scmp.eq.s32.totalorder %s16, 0
      %p111 = por %p109, %p110
      %p112 = scmp.ne.s32.totalorder %s101, %s104
      %p113 = scmp.eq.s32.totalorder %s21, 1
      %p114 = por %p112, %p113
      %p115 = scmp.ne.s32.totalorder %s104, %s105
      %p116 = scmp.eq.s32.totalorder %s21, 0
      %p117 = por %p115, %p116
      %p118 = scmp.ne.s32.totalorder %s104, %s105
      %p119 = scmp.eq.s32.totalorder %s22, 1
      %p120 = por %p118, %p119
      %p122 = scmp.ne.s32.totalorder %s105, %s121
      %p123 = scmp.eq.s32.totalorder %s22, 0
      %p124 = por %p122, %p123
      %s125 = ssub.s32 %s23, %s42
      %s126 = ssub.s32 %s24, %s38
      %s127 = sor.u32 %s125, %s126
      %p128 = scmp.eq.s32.totalorder %s127, 0
      %s130 = sadd.s32 %s129, 1
      %s131 = scalar_select %p128, %s129, %s130
      %p134 = pneg %p128
      %p135 = scmp.eq.s32.totalorder %s16, 1
      %p136 = por %p134, %p135
      %p137 = scmp.ne.s32.totalorder %s129, %s132
      %p138 = scmp.eq.s32.totalorder %s16, 0
      %p139 = por %p137, %p138
      %p140 = scmp.ne.s32.totalorder %s129, %s132
      %p141 = scmp.eq.s32.totalorder %s21, 1
      %p142 = por %p140, %p141
      %p143 = scmp.ne.s32.totalorder %s132, %s133
      %p144 = scmp.eq.s32.totalorder %s21, 0
      %p145 = por %p143, %p144
      %p146 = scmp.ne.s32.totalorder %s132, %s133
      %p147 = scmp.eq.s32.totalorder %s22, 1
      %p148 = por %p146, %p147
      %p150 = scmp.ne.s32.totalorder %s133, %s149
      %p151 = scmp.eq.s32.totalorder %s22, 0
      %p152 = por %p150, %p151
      %p153 = scmp.le.s32.totalorder 1, %s16
      %p154 = scmp.lt.s32.totalorder %s16, 3
      %p155 = pnand %p153, %p154
      %p156 = pneg %p155
      // Predicated region
      $region9: #{tpu_custom_call.1} parent=5 // pred_check
        _
      $region10: #{tpu_custom_call.1} parent=5 // pred_check_branch
        %158 = sbr.rel (%p155) target = $region12
      $region11: #{tpu_custom_call.1} parent=5 // pred_region
        %s159 = ssub.s32 %s16, 1
        // Predicated region
        $region13: #{tpu_custom_call.1} parent=11 // pred_check
          %p160 = pneg %p117
        $region14: #{tpu_custom_call.1} parent=11 // pred_check_branch
          %162 = sbr.rel (%p160) target = $region16
        $region15: #{tpu_custom_call.1} parent=11 // pred_region
          %p163 = scmp.lt.s32.totalorder %s27, 0
          %s164 = scalar_select %p163, %s27, 0
          %s165 = scalar_lea.vmem %s2, %s164
        $region16: #{tpu_custom_call.1} parent=11 // pred_fallthru
          _
      $region12: #{tpu_custom_call.1} parent=5 // pred_fallthru
        _
      %p166 = scmp.lt.s32.totalorder %s16, 2
      // Predicated region
      $region17: #{tpu_custom_call.1} parent=5 // pred_check
        %p167 = pneg %p166
      $region18: #{tpu_custom_call.1} parent=5 // pred_check_branch
        %169 = sbr.rel (%p167) target = $region20
      $region19: #{tpu_custom_call.1} parent=5 // pred_region
        // Predicated region
        $region21: #{tpu_custom_call.1} parent=19 // pred_check
          %p170 = pneg %p57
        $region22: #{tpu_custom_call.1} parent=19 // pred_check_branch
          %172 = sbr.rel (%p170) target = $region24
        $region23: #{tpu_custom_call.1} parent=19 // pred_region
          %s173 = sand.u32 %s47, 1
          %s174 = scalar_lea.sflag [#allocation4], %s173
          %s175 = sand.u32 %s47, 1
          %s176 = smul.addr %s175, 32
          %s177 = scalar_lea.vmem [#allocation3], %s176
          %s178 = smul.u32 4, %s25
          %180 = vsyncadd %s174, 0
          %s181 = smul.addr %s23, 8
          %s182 = sadd.s32 %s178, %s181
          %s183 = smul.addr %s182, 8
          %s184 = scalar_lea.hbm %s0, %s183
          %s186 = sshll.u32 %s184, 4
          %s187 = int_to_ptr.hbm [resolvable:$true] %s186
          %s188 = sshll.u32 %s177, 4
          %s189 = int_to_ptr.vmem [resolvable:$true] %s188
          %191 = dma.hbm_to_vmem [thread:$0]  %s187, 512, %s189, %s174
        $region24: #{tpu_custom_call.1} parent=19 // pred_fallthru
          _
        // Predicated region
        $region25: #{tpu_custom_call.1} parent=19 // pred_check
          %p192 = pneg %p85
        $region26: #{tpu_custom_call.1} parent=19 // pred_check_branch
          %194 = sbr.rel (%p192) target = $region28
        $region27: #{tpu_custom_call.1} parent=19 // pred_region
          %s195 = sand.u32 %s75, 1
          %s196 = scalar_lea.sflag [#allocation7], %s195
          %s197 = sand.u32 %s75, 1
          %s198 = smul.addr %s197, 512
          %s199 = scalar_lea.vmem [#allocation6], %s198
          %s200 = smul.u32 64, %s25
          %202 = vsyncadd %s196, 0
          %s203 = sadd.s32 %s24, %s200
          %s204 = smul.addr %s203, 8
          %s205 = scalar_lea.hbm %s1, %s204
          %s206 = sshll.u32 %s205, 4
          %s207 = int_to_ptr.hbm [resolvable:$true] %s206
          %s208 = sshll.u32 %s199, 4
          %s209 = int_to_ptr.vmem [resolvable:$true] %s208
          %214 = dma.hbm_to_vmem [thread:$0]  %s207, 8192, %s209, %s196, 128, 128, 8
        $region28: #{tpu_custom_call.1} parent=19 // pred_fallthru
          _
      $region20: #{tpu_custom_call.1} parent=5 // pred_fallthru
        _
      %p215 = scmp.le.s32.totalorder 1, %s16
      %p216 = scmp.lt.s32.totalorder %s16, 3
      %p217 = pnand %p215, %p216
      %p218 = pneg %p217
      // Predicated region
      $region29: #{tpu_custom_call.1} parent=5 // pred_check
        _
      $region30: #{tpu_custom_call.1} parent=5 // pred_check_branch
        %220 = sbr.rel (%p217) target = $region32
      $region31: #{tpu_custom_call.1} parent=5 // pred_region
        %s221 = ssub.s32 %s16, 1
        %s222 = sand.u32 %s50, 1
        %s223 = scalar_lea.sflag [#allocation4], %s222
        %s224 = sand.u32 %s50, 1
        %s225 = smul.addr %s224, 32
        %s226 = scalar_lea.vmem [#allocation3], %s225
        // Predicated region
        $region33: #{tpu_custom_call.1} parent=31 // pred_check
          %p227 = pneg %p63
        $region34: #{tpu_custom_call.1} parent=31 // pred_check_branch
          %229 = sbr.rel (%p227) target = $region36
        $region35: #{tpu_custom_call.1} parent=31 // pred_region
          %231 = dma.done %s223, 512
        $region36: #{tpu_custom_call.1} parent=31 // pred_fallthru
          _
        %s232 = sand.u32 %s78, 1
        %s233 = scalar_lea.sflag [#allocation7], %s232
        %s234 = sand.u32 %s78, 1
        %s235 = smul.addr %s234, 512
        %s236 = scalar_lea.vmem [#allocation6], %s235
        // Predicated region
        $region37: #{tpu_custom_call.1} parent=31 // pred_check
          %p237 = pneg %p91
        $region38: #{tpu_custom_call.1} parent=31 // pred_check_branch
          %239 = sbr.rel (%p237) target = $region40
        $region39: #{tpu_custom_call.1} parent=31 // pred_region
          %241 = dma.done %s233, 8192
        $region40: #{tpu_custom_call.1} parent=31 // pred_fallthru
          _
        %s242 = sand.u32 %s50, 1
        %s243 = scalar_lea.sflag [#allocation4], %s242
        %s244 = sand.u32 %s50, 1
        %s245 = smul.addr %s244, 32
        %s246 = scalar_lea.vmem [#allocation3], %s245
        %p247 = pneg %p63
        %p248 = pneg %p60
        %s249 = sand.u32 %s78, 1
        %s250 = scalar_lea.sflag [#allocation7], %s249
        %s251 = sand.u32 %s78, 1
        %s252 = smul.addr %s251, 512
        %s253 = scalar_lea.vmem [#allocation6], %s252
        %p254 = pneg %p91
        %p255 = pneg %p88
        %p256 = scmp.lt.s32.totalorder %s27, 0
        %s257 = scalar_select %p256, %s27, 0
        %s258 = scalar_lea.vmem %s2, %s257
        %p259 = pneg %p117
        %p260 = pneg %p114
        %p261 = pneg %p145
        %p262 = pneg %p142
        %s263 = smul.u32 4, %s28
        %s264 = smul.u32 64, %s28
        %p265 = scmp.lt.s32.totalorder %s27, 0
        %s266 = scalar_select %p265, %s27, 0
        %s267 = scalar_lea.vmem %s2, %s266
        %p268 = scmp.eq.s32.totalorder %s28, 0
        // Predicated region
        $region41: #{tpu_custom_call.1} parent=31 // pred_check
          %p269 = pneg %p268
        $region42: #{tpu_custom_call.1} parent=31 // pred_check_branch
          %271 = sbr.rel (%p269) target = $region44
        $region43: #{tpu_custom_call.1} parent=31 // pred_region
          %272 = vst [vmem:[#allocation2] sm:$0xff] 0.0
        $region44: #{tpu_custom_call.1} parent=31 // pred_fallthru
          _
        %v273 = vld [vmem:[#allocation2] sm:$0xff]
        %v274 = vld [vmem:[%s226] sm:$0xff]
        %v275 = vld [vmem:[%s226 + $0x8] sm:$0xff]
        %v276 = vld [vmem:[%s226 + $0x10] sm:$0xff]
        %v277 = vld [vmem:[%s226 + $0x18] sm:$0xff]
        %v278 = vld [vmem:[%s236] sm:$0xff]
        %v279 = vld [vmem:[%s236 + $0x8] sm:$0xff]
        %v280 = vld [vmem:[%s236 + $0x10] sm:$0xff]
        %v281 = vld [vmem:[%s236 + $0x18] sm:$0xff]
        %v282 = vld [vmem:[%s236 + $0x20] sm:$0xff]
        %v283 = vld [vmem:[%s236 + $0x28] sm:$0xff]
        %v284 = vld [vmem:[%s236 + $0x30] sm:$0xff]
        %v285 = vld [vmem:[%s236 + $0x38] sm:$0xff]
        %v286 = vld [vmem:[%s236 + $0x40] sm:$0xff]
        %v287 = vld [vmem:[%s236 + $0x48] sm:$0xff]
        %v288 = vld [vmem:[%s236 + $0x50] sm:$0xff]
        %v289 = vld [vmem:[%s236 + $0x58] sm:$0xff]
        %v290 = vld [vmem:[%s236 + $0x60] sm:$0xff]
        %v291 = vld [vmem:[%s236 + $0x68] sm:$0xff]
        %v292 = vld [vmem:[%s236 + $0x70] sm:$0xff]
        %v293 = vld [vmem:[%s236 + $0x78] sm:$0xff]
        %v294 = vld [vmem:[%s236 + $0x80] sm:$0xff]
        %v295 = vld [vmem:[%s236 + $0x88] sm:$0xff]
        %v296 = vld [vmem:[%s236 + $0x90] sm:$0xff]
        %v297 = vld [vmem:[%s236 + $0x98] sm:$0xff]
        %v298 = vld [vmem:[%s236 + $0xa0] sm:$0xff]
        %v299 = vld [vmem:[%s236 + $0xa8] sm:$0xff]
        %v300 = vld [vmem:[%s236 + $0xb0] sm:$0xff]
        %v301 = vld [vmem:[%s236 + $0xb8] sm:$0xff]
        %v302 = vld [vmem:[%s236 + $0xc0] sm:$0xff]
        %v303 = vld [vmem:[%s236 + $0xc8] sm:$0xff]
        %v304 = vld [vmem:[%s236 + $0xd0] sm:$0xff]
        %v305 = vld [vmem:[%s236 + $0xd8] sm:$0xff]
        %v306 = vld [vmem:[%s236 + $0xe0] sm:$0xff]
        %v307 = vld [vmem:[%s236 + $0xe8] sm:$0xff]
        %v308 = vld [vmem:[%s236 + $0xf0] sm:$0xff]
        %v309 = vld [vmem:[%s236 + $0xf8] sm:$0xff]
        %v310 = vld [vmem:[%s236 + $0x100] sm:$0xff]
        %v311 = vld [vmem:[%s236 + $0x108] sm:$0xff]
        %v312 = vld [vmem:[%s236 + $0x110] sm:$0xff]
        %v313 = vld [vmem:[%s236 + $0x118] sm:$0xff]
        %v314 = vld [vmem:[%s236 + $0x120] sm:$0xff]
        %v315 = vld [vmem:[%s236 + $0x128] sm:$0xff]
        %v316 = vld [vmem:[%s236 + $0x130] sm:$0xff]
        %v317 = vld [vmem:[%s236 + $0x138] sm:$0xff]
        %v318 = vld [vmem:[%s236 + $0x140] sm:$0xff]
        %v319 = vld [vmem:[%s236 + $0x148] sm:$0xff]
        %v320 = vld [vmem:[%s236 + $0x150] sm:$0xff]
        %v321 = vld [vmem:[%s236 + $0x158] sm:$0xff]
        %v322 = vld [vmem:[%s236 + $0x160] sm:$0xff]
        %v323 = vld [vmem:[%s236 + $0x168] sm:$0xff]
        %v324 = vld [vmem:[%s236 + $0x170] sm:$0xff]
        %v325 = vld [vmem:[%s236 + $0x178] sm:$0xff]
        %v326 = vld [vmem:[%s236 + $0x180] sm:$0xff]
        %v327 = vld [vmem:[%s236 + $0x188] sm:$0xff]
        %v328 = vld [vmem:[%s236 + $0x190] sm:$0xff]
        %v329 = vld [vmem:[%s236 + $0x198] sm:$0xff]
        %v330 = vld [vmem:[%s236 + $0x1a0] sm:$0xff]
        %v331 = vld [vmem:[%s236 + $0x1a8] sm:$0xff]
        %v332 = vld [vmem:[%s236 + $0x1b0] sm:$0xff]
        %v333 = vld [vmem:[%s236 + $0x1b8] sm:$0xff]
        %v334 = vld [vmem:[%s236 + $0x1c0] sm:$0xff]
        %v335 = vld [vmem:[%s236 + $0x1c8] sm:$0xff]
        %v336 = vld [vmem:[%s236 + $0x1d0] sm:$0xff]
        %v337 = vld [vmem:[%s236 + $0x1d8] sm:$0xff]
        %v338 = vld [vmem:[%s236 + $0x1e0] sm:$0xff]
        %v339 = vld [vmem:[%s236 + $0x1e8] sm:$0xff]
        %v340 = vld [vmem:[%s236 + $0x1f0] sm:$0xff]
        %v341 = vld [vmem:[%s236 + $0x1f8] sm:$0xff]
        %342 = vmatpush.msra.mxu0 %v293
        %343 = vmatpush.msra.mxu0 %v292
        %344 = vmatpush.msra.mxu0 %v291
        %345 = vmatpush.msra.mxu0 %v290
        %346 = vmatpush.msra.mxu0 %v289
        %347 = vmatpush.msra.mxu0 %v288
        %348 = vmatpush.msra.mxu0 %v287
        %349 = vmatpush.msra.mxu0 %v286
        %350 = vmatpush.msra.mxu0 %v285
        %351 = vmatpush.msra.mxu0 %v284
        %352 = vmatpush.msra.mxu0 %v283
        %353 = vmatpush.msra.mxu0 %v282
        %354 = vmatpush.msra.mxu0 %v281
        %355 = vmatpush.msra.mxu0 %v280
        %356 = vmatpush.msra.mxu0 %v279
        %357 = vmatpush.msra.mxu0 %v278
        %358 = vmatmul.f32.gmra.mxu0 %v274
        %v359 = vpop.f32.mrf.mxu0
        %v360 = vadd.f32 0.0, %v359
        %361 = vdwg.mxu0
        %362 = vmatpush.msra.mxu0 %v309
        %363 = vmatpush.msra.mxu0 %v308
        %364 = vmatpush.msra.mxu0 %v307
        %365 = vmatpush.msra.mxu0 %v306
        %366 = vmatpush.msra.mxu0 %v305
        %367 = vmatpush.msra.mxu0 %v304
        %368 = vmatpush.msra.mxu0 %v303
        %369 = vmatpush.msra.mxu0 %v302
        %370 = vmatpush.msra.mxu0 %v301
        %371 = vmatpush.msra.mxu0 %v300
        %372 = vmatpush.msra.mxu0 %v299
        %373 = vmatpush.msra.mxu0 %v298
        %374 = vmatpush.msra.mxu0 %v297
        %375 = vmatpush.msra.mxu0 %v296
        %376 = vmatpush.msra.mxu0 %v295
        %377 = vmatpush.msra.mxu0 %v294
        %378 = vmatmul.f32.gmra.mxu0 %v275
        %v379 = vpop.f32.mrf.mxu0
        %v380 = vadd.f32 %v360, %v379
        %381 = vdwg.mxu0
        %382 = vmatpush.msra.mxu0 %v325
        %383 = vmatpush.msra.mxu0 %v324
        %384 = vmatpush.msra.mxu0 %v323
        %385 = vmatpush.msra.mxu0 %v322
        %386 = vmatpush.msra.mxu0 %v321
        %387 = vmatpush.msra.mxu0 %v320
        %388 = vmatpush.msra.mxu0 %v319
        %389 = vmatpush.msra.mxu0 %v318
        %390 = vmatpush.msra.mxu0 %v317
        %391 = vmatpush.msra.mxu0 %v316
        %392 = vmatpush.msra.mxu0 %v315
        %393 = vmatpush.msra.mxu0 %v314
        %394 = vmatpush.msra.mxu0 %v313
        %395 = vmatpush.msra.mxu0 %v312
        %396 = vmatpush.msra.mxu0 %v311
        %397 = vmatpush.msra.mxu0 %v310
        %398 = vmatmul.f32.gmra.mxu0 %v276
        %v399 = vpop.f32.mrf.mxu0
        %v400 = vadd.f32 %v380, %v399
        %401 = vdwg.mxu0
        %402 = vmatpush.msra.mxu0 %v341
        %403 = vmatpush.msra.mxu0 %v340
        %404 = vmatpush.msra.mxu0 %v339
        %405 = vmatpush.msra.mxu0 %v338
        %406 = vmatpush.msra.mxu0 %v337
        %407 = vmatpush.msra.mxu0 %v336
        %408 = vmatpush.msra.mxu0 %v335
        %409 = vmatpush.msra.mxu0 %v334
        %410 = vmatpush.msra.mxu0 %v333
        %411 = vmatpush.msra.mxu0 %v332
        %412 = vmatpush.msra.mxu0 %v331
        %413 = vmatpush.msra.mxu0 %v330
        %414 = vmatpush.msra.mxu0 %v329
        %415 = vmatpush.msra.mxu0 %v328
        %416 = vmatpush.msra.mxu0 %v327
        %417 = vmatpush.msra.mxu0 %v326
        %418 = vmatmul.f32.gmra.mxu0 %v277
        %v419 = vpop.f32.mrf.mxu0
        %v420 = vadd.f32 %v400, %v419
        %421 = vdwg.mxu0
        %v422 = vadd.f32 %v273, %v420
        %423 = vst [vmem:[#allocation2] sm:$0xff] %v422
        %p424 = scmp.eq.s32.totalorder %s28, 1
        // Predicated region
        $region45: #{tpu_custom_call.1} parent=31 // pred_check
          %p425 = pneg %p424
        $region46: #{tpu_custom_call.1} parent=31 // pred_check_branch
          %427 = sbr.rel (%p425) target = $region48
        $region47: #{tpu_custom_call.1} parent=31 // pred_region
          %v428 = vld [vmem:[#allocation2] sm:$0xff]
          %v429 = vld [vmem:[%s267] sm:$0x1]
          %v431 = vperm.slane %v429, 0
          %v433 = vadd.f32 %v428, %v431
          %434 = vst [vmem:[#allocation8] sm:$0xff] %v433
        $region48: #{tpu_custom_call.1} parent=31 // pred_fallthru
          _
        // Predicated region
        $region49: #{tpu_custom_call.1} parent=31 // pred_check
          %p435 = pneg %p142
        $region50: #{tpu_custom_call.1} parent=31 // pred_check_branch
          %437 = sbr.rel (%p435) target = $region52
        $region51: #{tpu_custom_call.1} parent=31 // pred_region
          %439 = vsyncadd [#allocation5], 0
          %s440 = sadd.s32 %s27, %s26
          %s441 = smul.addr %s440, 8
          %s442 = scalar_lea.hbm %s3, %s441
          %s444 = sshll.u32 [#allocation8], 4
          %s445 = int_to_ptr.vmem [resolvable:$true] %s444
          %s446 = sshll.u32 %s442, 4
          %s447 = int_to_ptr.hbm [resolvable:$true] %s446
          %449 = dma.vmem_to_hbm [thread:$0]  %s445, 128, %s447, [#allocation5]
        $region52: #{tpu_custom_call.1} parent=31 // pred_fallthru
          _
        // Predicated region
        $region53: #{tpu_custom_call.1} parent=31 // pred_check
          %p450 = pneg %p142
        $region54: #{tpu_custom_call.1} parent=31 // pred_check_branch
          %452 = sbr.rel (%p450) target = $region56
        $region55: #{tpu_custom_call.1} parent=31 // pred_region
          %454 = dma.done [#allocation5], 128
        $region56: #{tpu_custom_call.1} parent=31 // pred_fallthru
          _
      $region32: #{tpu_custom_call.1} parent=5 // pred_fallthru
        _
      %p455 = scmp.le.s32.totalorder 2, %s16
      // Predicated region
      $region57: #{tpu_custom_call.1} parent=5 // pred_check
        %p456 = pneg %p455
      $region58: #{tpu_custom_call.1} parent=5 // pred_check_branch
        %458 = sbr.rel (%p456) target = $region60
      $region59: #{tpu_custom_call.1} parent=5 // pred_region
        %s459 = ssub.s32 %s16, 2
      $region60: #{tpu_custom_call.1} parent=5 // pred_fallthru
        _
    $region6: #{tpu_custom_call.1} parent=1 // loop_footer
      %s20 = sadd.s32 1, %s16
    $region7: #{tpu_custom_call.1} parent=1 // loop_footer_branch
      %15 = sbr.rel target = $region3
    $region8: #{tpu_custom_call.1} parent=1 // loop_exit
      _
    %460 = vsyncpa [#allocation4], 1
    %s461 = scalar_lea.sflag [#allocation4], 1
    %462 = vsyncpa %s461, 1
    %463 = vsyncpa [#allocation7], 1
    %s464 = scalar_lea.sflag [#allocation7], 1
    %465 = vsyncpa %s464, 1
    %466 = vsyncpa [#allocation5], 1
    %s467 = scalar_lea.sflag [#allocation5], 1
    %468 = vsyncpa %s467, 1

</llo_original>
